<compile_context>
chip_gen: v7x
topology: tpu7x:2x2x1
jax: 0.10.0
libtpu: 0.0.40
codegen_flags: <defaults>
</compile_context>

<pallas_src>
import functools

import jax
import jax.numpy as jnp
from jax.experimental import pallas as pl
from jax.experimental.pallas import tpu as pltpu


def _cdiv(a, b):
    return -(-a // b)


def _ceil_to(a, m):
    return _cdiv(a, m) * m


def _block_compactor_kernel(x_ref, wc_ref, bc_ref, o_ref, *, block_size):
    """One grid step: TB token-blocks -> TB compacted rows.

    x_ref  : (block_size, TB, Hp)  bf16/f32 -- block_size leads, so every
             pooled add is a dense, lane/sublane-aligned (TB, Hp) slab.
    wc_ref : (Hp, Hp)  bf16/f32 -- folded (pre_pool o mean o post_pool) weight,
             (in, out) layout, with the 1/block_size mean scale folded in.
    bc_ref : (1, Hp)   f32 -- folded bias  b1 @ W2^T + b2.
    o_ref  : (TB, Hp)  f32.
    """
    # Block sum (mean scale already folded into wc): block_size dense VPU adds,
    # accumulated in f32.
    acc = x_ref[0].astype(jnp.float32)
    for j in range(1, block_size):
        acc = acc + x_ref[j].astype(jnp.float32)

    # Single fused affine on the MXU, f32 accumulation:
    #   (pooled @ W1^T + b1) @ W2^T + b2 == pooled @ (W1^T W2^T) + (b1 W2^T + b2)
    z = jnp.dot(acc.astype(wc_ref.dtype), wc_ref[...],
                preferred_element_type=jnp.float32) + bc_ref[...]
    o_ref[...] = z.astype(o_ref.dtype)


@functools.partial(jax.jit,
                   static_argnames=("block_size", "blocks_per_tile", "use_bf16"))
def block_compactor(x, w1, b1, w2, b2, *, block_size=4, blocks_per_tile=None,
                    use_bf16=True):
    """x: [B, S, H].  w1, w2: [H, H] (PyTorch Linear (out, in) layout).
    b1, b2: [H].  Returns [B, ceil(S / block_size), H] in x.dtype."""
    B, S, H = x.shape
    bs = block_size
    out_dtype = x.dtype
    op_dtype = jnp.bfloat16 if use_bf16 else jnp.float32
    f32 = jnp.float32

    LANE = 128
    Hp = _ceil_to(H, LANE)

    # ---- glue: pad seq to a multiple of block_size with zeros (ref semantics).
    if S % bs != 0:
        x = jnp.pad(x, ((0, 0), (0, bs - S % bs), (0, 0)))
    S_pad = x.shape[1]
    n_blocks = S_pad // bs
    NB = B * n_blocks                      # total (batch, block) pairs

    # ---- fold the two affine layers (exact: nothing nonlinear in between) and
    #      fold the 1/block_size mean scale into the composed weight.
    hi = jax.lax.Precision.HIGHEST
    w1t = w1.T.astype(f32)                 # (in, out)
    w2t = w2.T.astype(f32)
    wc = jnp.dot(w1t, w2t, precision=hi) * (1.0 / bs)
    bc = jnp.dot(b1.astype(f32), w2t, precision=hi) + b2.astype(f32)
    wc_p = jnp.pad(wc, ((0, Hp - H), (0, Hp - H))).astype(op_dtype)
    bc_p = jnp.pad(bc, (0, Hp - H)).reshape(1, Hp).astype(f32)

    # ---- pick the block-tile size TB (sublane dim of each grid step).
    if blocks_per_tile is None:
        blocks_per_tile = 512 if Hp <= 1024 else 256   # >= 1 MiB of x per step
    if NB <= 256:
        TB = NB                                        # single full-dim tile
    else:
        # >= 2 tiles (feeds both TensorCores on v7x), TB a multiple of 128.
        TB = min(blocks_per_tile, _ceil_to(_cdiv(NB, 2), 128))

    # ---- VMEM budget: clamp to the device (v7x has 64 MiB) and shrink TB
    #      (never Hp) until the working set fits.  x/out are double-buffered,
    #      the folded weight/bias are single-buffered (pl.Buffered(1)).
    try:
        vmem_cap = int(pltpu.get_tpu_info().vmem_capacity_bytes)
    except Exception:
        vmem_cap = 128 << 20
    vmem_usable = vmem_cap - (8 << 20)
    x_bytes = 2 if use_bf16 else 4

    def vmem_est(tb):
        x_tile = bs * tb * Hp * x_bytes              # double-buffered
        o_tile = tb * Hp * 4                         # double-buffered, f32
        w_bytes = Hp * Hp * (2 if use_bf16 else 4)   # single-buffered
        bias_bytes = 8 * Hp * 4                      # single-buffered
        return 2 * (x_tile + o_tile) + w_bytes + bias_bytes + (2 << 20)

    while TB > 16 and vmem_est(TB) > vmem_usable:
        TB = _ceil_to(_cdiv(TB, 2), 16)
    # TODO(synk): for very large Hp (>~6k) the single folded weight no longer
    # fits v7x VMEM even single-buffered; add a second grid axis over Hp_out.

    num_tiles = _cdiv(NB, TB)
    if num_tiles == 1:
        TB = NB
    NB_pad = num_tiles * TB

    # ---- one fused copy over x: split into blocks, move block_size to the
    #      leading axis (TB becomes the sublane dim), pad NB and H, cast to the
    #      MXU operand dtype.  Under jit this is a single HBM pass.
    xb = x.reshape(B, n_blocks, bs, H)
    xb = jnp.transpose(xb, (2, 0, 1, 3)).reshape(bs, NB, H)
    xb = jnp.pad(xb, ((0, 0), (0, NB_pad - NB), (0, Hp - H))).astype(op_dtype)

    vmem_limit = int(min(vmem_usable, max(vmem_est(TB) + (4 << 20), 32 << 20)))

    kernel = functools.partial(_block_compactor_kernel, block_size=bs)

    out = pl.pallas_call(
        kernel,
        out_shape=jax.ShapeDtypeStruct((NB_pad, Hp), jnp.float32),
        grid_spec=pltpu.PrefetchScalarGridSpec(
            num_scalar_prefetch=0,
            grid=(num_tiles,),
            in_specs=[
                # x blocks: (block_size, TB, Hp) with TB on the sublane axis.
                pl.BlockSpec((bs, TB, Hp), lambda i: (0, i, 0)),
                # folded weight / bias: constant index_map -> single buffer.
                pl.BlockSpec((Hp, Hp), lambda i: (0, 0),
                             pipeline_mode=pl.Buffered(1)),
                pl.BlockSpec((1, Hp), lambda i: (0, 0),
                             pipeline_mode=pl.Buffered(1)),
            ],
            out_specs=pl.BlockSpec((TB, Hp), lambda i: (i, 0)),
        ),
        compiler_params=pltpu.CompilerParams(
            dimension_semantics=("parallel",),
            vmem_limit_bytes=vmem_limit),
    )(xb, wc_p, bc_p)

    # Drop block-tile / hidden padding, restore (B, n_blocks, H).
    return out[:NB, :H].reshape(B, n_blocks, H).astype(out_dtype)


def _reference(x, w1, b1, w2, b2, block_size):
    """Pure-JAX f32 reference mirroring the PyTorch forward."""
    B, S, H = x.shape
    hi = jax.lax.Precision.HIGHEST
    if S % block_size != 0:
        pad_len = block_size - S % block_size
        x = jnp.concatenate([x, jnp.zeros((B, pad_len, H), x.dtype)], axis=1)
    S = x.shape[1]
    x = jnp.dot(x, w1.T, precision=hi) + b1
    x = x.reshape(B, S // block_size, block_size, H).mean(axis=2)
    x = jnp.dot(x, w2.T, precision=hi) + b2
    return x


if __name__ == "__main__":
    key = jax.random.PRNGKey(0)
    B, S, H = 2, 8, 32
    block_size = 4

    k_x, k_w1, k_b1, k_w2, k_b2 = jax.random.split(key, 5)
    x = jax.random.normal(k_x, (B, S, H), dtype=jnp.float32)
    # nn.Linear(hidden, hidden) shaped synthetic parameters.
    w1 = jax.random.normal(k_w1, (H, H), dtype=jnp.float32) * 0.05
    b1 = jax.random.normal(k_b1, (H,), dtype=jnp.float32) * 0.05
    w2 = jax.random.normal(k_w2, (H, H), dtype=jnp.float32) * 0.05
    b2 = jax.random.normal(k_b2, (H,), dtype=jnp.float32) * 0.05

    out = block_compactor(x, w1, b1, w2, b2, block_size=block_size)
    out = jax.block_until_ready(out)

    ref = _reference(x, w1, b1, w2, b2, block_size)
    assert out.shape == (B, S // block_size, H), out.shape
    # Tolerance accounts for the bf16 MXU operands (f32 accumulation).
    assert jnp.allclose(out, ref, atol=2e-2, rtol=2e-2), "mismatch vs reference"

    print("KERNEL_OK")
</pallas_src>

<mosaic_0001>
module attributes {stable_mosaic.version = 11 : i64} {
  func.func @_block_compactor_kernel(%arg0: i32, %arg1: memref<4x4x128xbf16, #tpu.memory_space<vmem>>, %arg2: memref<128x128xbf16, #tpu.memory_space<vmem>>, %arg3: memref<1x128xf32, #tpu.memory_space<vmem>>, %arg4: memref<4x128xf32, #tpu.memory_space<vmem>>) attributes {dimension_semantics = [#tpu.dimension_semantics<parallel>], iteration_bounds = array<i64: 1>, scalar_prefetch = 0 : i64, scratch_operands = 0 : i64, tpu.core_type = #tpu.core_type<tc>, window_params = [{transform_indices = @transform_0, window_bounds = array<i64: 4, 4, 128>}, {pipeline_mode = #tpu.pipeline_mode<synchronous>, transform_indices = @transform_1, window_bounds = array<i64: 128, 128>}, {pipeline_mode = #tpu.pipeline_mode<synchronous>, transform_indices = @transform_2, window_bounds = array<i64: 1, 128>}, {transform_indices = @transform_3, window_bounds = array<i64: 4, 128>}]} {
    %c0 = arith.constant 0 : index
    %c0_0 = arith.constant 0 : index
    %c0_1 = arith.constant 0 : index
    %0 = vector.load %arg1[%c0, %c0_0, %c0_1] : memref<4x4x128xbf16, #tpu.memory_space<vmem>>, vector<1x4x128xbf16>
    %1 = vector.shape_cast %0 : vector<1x4x128xbf16> to vector<4x128xbf16>
    %2 = arith.extf %1 : vector<4x128xbf16> to vector<4x128xf32>
    %c1 = arith.constant 1 : index
    %c0_2 = arith.constant 0 : index
    %c0_3 = arith.constant 0 : index
    %3 = vector.load %arg1[%c1, %c0_2, %c0_3] : memref<4x4x128xbf16, #tpu.memory_space<vmem>>, vector<1x4x128xbf16>
    %4 = vector.shape_cast %3 : vector<1x4x128xbf16> to vector<4x128xbf16>
    %5 = arith.extf %4 : vector<4x128xbf16> to vector<4x128xf32>
    %6 = arith.addf %2, %5 : vector<4x128xf32>
    %c2 = arith.constant 2 : index
    %c0_4 = arith.constant 0 : index
    %c0_5 = arith.constant 0 : index
    %7 = vector.load %arg1[%c2, %c0_4, %c0_5] : memref<4x4x128xbf16, #tpu.memory_space<vmem>>, vector<1x4x128xbf16>
    %8 = vector.shape_cast %7 : vector<1x4x128xbf16> to vector<4x128xbf16>
    %9 = arith.extf %8 : vector<4x128xbf16> to vector<4x128xf32>
    %10 = arith.addf %6, %9 : vector<4x128xf32>
    %c3 = arith.constant 3 : index
    %c0_6 = arith.constant 0 : index
    %c0_7 = arith.constant 0 : index
    %11 = vector.load %arg1[%c3, %c0_6, %c0_7] : memref<4x4x128xbf16, #tpu.memory_space<vmem>>, vector<1x4x128xbf16>
    %12 = vector.shape_cast %11 : vector<1x4x128xbf16> to vector<4x128xbf16>
    %13 = arith.extf %12 : vector<4x128xbf16> to vector<4x128xf32>
    %14 = arith.addf %10, %13 : vector<4x128xf32>
    %15 = arith.truncf %14 : vector<4x128xf32> to vector<4x128xbf16>
    %c0_8 = arith.constant 0 : index
    %c0_9 = arith.constant 0 : index
    %16 = vector.load %arg2[%c0_8, %c0_9] : memref<128x128xbf16, #tpu.memory_space<vmem>>, vector<128x128xbf16>
    %cst = arith.constant dense<0.000000e+00> : vector<4x128xf32>
    %17 = tpu.matmul %15, %16, %cst {dimension_numbers = #tpu.dot_dimension_numbers<[1], [0], [0], [1], [0, 0, 1, 1], [], []>} : vector<4x128xbf16>, vector<128x128xbf16>, vector<4x128xf32> -> vector<4x128xf32>
    %c0_10 = arith.constant 0 : index
    %c0_11 = arith.constant 0 : index
    %18 = vector.load %arg3[%c0_10, %c0_11] : memref<1x128xf32, #tpu.memory_space<vmem>>, vector<1x128xf32>
    %19 = vector.broadcast %18 : vector<1x128xf32> to vector<4x128xf32>
    %20 = arith.addf %17, %19 : vector<4x128xf32>
    %c0_12 = arith.constant 0 : index
    %c0_13 = arith.constant 0 : index
    %21 = vector.load %arg4[%c0_12, %c0_13] : memref<4x128xf32, #tpu.memory_space<vmem>>, vector<4x128xf32>
    tpu.vector_store %arg4[%c0_12, %c0_13], %20 {strides = array<i32>} : memref<4x128xf32, #tpu.memory_space<vmem>>, vector<4x128xf32>,
    return
  }
  func.func @transform_0(%arg0: i32) -> (i32, i32, i32) {
    %c0_i32 = arith.constant 0 : i32
    %c0_i32_0 = arith.constant 0 : i32
    %c0_i32_1 = arith.constant 0 : i32
    return %c0_i32, %arg0, %c0_i32_0 : i32, i32, i32
  }
  func.func @transform_1(%arg0: i32) -> (i32, i32) {
    %c0_i32 = arith.constant 0 : i32
    %c0_i32_0 = arith.constant 0 : i32
    %c0_i32_1 = arith.constant 0 : i32
    return %c0_i32, %c0_i32_0 : i32, i32
  }
  func.func @transform_2(%arg0: i32) -> (i32, i32) {
    %c0_i32 = arith.constant 0 : i32
    %c0_i32_0 = arith.constant 0 : i32
    %c0_i32_1 = arith.constant 0 : i32
    return %c0_i32, %c0_i32_0 : i32, i32
  }
  func.func @transform_3(%arg0: i32) -> (i32, i32) {
    %c0_i32 = arith.constant 0 : i32
    %c0_i32_0 = arith.constant 0 : i32
    return %arg0, %c0_i32 : i32, i32
  }
}

</mosaic_0001>

<llo_original>
// kernel: block_compactor.1
$region0: #{block_compactor.1}
  #allocation0 [shape = 'u32[]', space=smem, size = 0x4, offset = 0x4, fixed_abs, tag = 'smem constant byte address 0x4 - core index']
  #allocation1 [shape = 'u32[144,128]{1,0:T(1,128)}', space=vmem, size = 0x12000, scoped, tag = 'internal scratch']
  %s0 = inlined_call_operand.vmem [shape: bf16[4,4,128], index: 0, kind: input, shape index: {}]
  %s1 = inlined_call_operand.vmem [shape: bf16[128,128], index: 1, kind: input, shape index: {}]
  %s2 = inlined_call_operand.vmem [shape: f32[1,128], index: 2, kind: input, shape index: {}]
  %s3 = inlined_call_operand.hbm [shape: f32[4,128], index: 3, kind: output, shape index: {}]
  %s4 = sld [smem:[#allocation0]]
  $region22: #{block_compactor.1} parent=0
    _
  %s6 = ssub.s32 1, %s4
  %s7 = scalar_select 0, %s6, %s4
  $region1: #{block_compactor.1} parent=0
    #allocation2 [shape = 'u8[2048]{0}', space=vmem, size = 0x800, scoped, tag = 'output window, operand 0, single buffered']
    #allocation3 [shape = 's32[1]{0}', space=sflag, size = 0x4, scoped, tag = 'scoped memory for block_compactor.1']
    %8 = vsyncpa [#allocation3], 0
    // Predicated region
    $region2: #{block_compactor.1} parent=1 // pred_check
      _
    $region3: #{block_compactor.1} parent=1 // pred_check_branch
      %10 = sbr.rel (0) target = $region5
    $region4: #{block_compactor.1} parent=1 // pred_region
      _
    $region5: #{block_compactor.1} parent=1 // pred_fallthru
      _
    // Predicated region
    $region6: #{block_compactor.1} parent=1 // pred_check
      _
    $region7: #{block_compactor.1} parent=1 // pred_check_branch
      %12 = sbr.rel (0) target = $region9
    $region8: #{block_compactor.1} parent=1 // pred_region
      _
    $region9: #{block_compactor.1} parent=1 // pred_fallthru
      _
    // Predicated region
    $region10: #{block_compactor.1} parent=1 // pred_check
      _
    $region11: #{block_compactor.1} parent=1 // pred_check_branch
      %14 = sbr.rel (0) target = $region13
    $region12: #{block_compactor.1} parent=1 // pred_region
      _
    $region13: #{block_compactor.1} parent=1 // pred_fallthru
      _
    %v16 = vld [vmem:[%s0] sm:$0x3]
    %v17 = vunpack.c.l.bf16 %v16
    %s18 = scalar_lea.vmem %s0, 2
    %v19 = vld [vmem:[%s18] sm:$0x3]
    %v20 = vunpack.c.l.bf16 %v19
    %v21 = vadd.f32 %v17, %v20
    %s22 = scalar_lea.vmem %s0, 4
    %v23 = vld [vmem:[%s22] sm:$0x3]
    %v24 = vunpack.c.l.bf16 %v23
    %v25 = vadd.f32 %v21, %v24
    %s26 = scalar_lea.vmem %s0, 6
    %v27 = vld [vmem:[%s26] sm:$0x3]
    %v28 = vunpack.c.l.bf16 %v27
    %v29 = vadd.f32 %v25, %v28
    %v30 = vpack.c.bf16 %v29, %v29
    %v31 = vld [vmem:[%s1] sm:$0xf]
    %v32 = vld [vmem:[%s1 + $0x4] sm:$0xf]
    %v33 = vld [vmem:[%s1 + $0x8] sm:$0xf]
    %v34 = vld [vmem:[%s1 + $0xc] sm:$0xf]
    %v35 = vld [vmem:[%s1 + $0x10] sm:$0xf]
    %v36 = vld [vmem:[%s1 + $0x14] sm:$0xf]
    %v37 = vld [vmem:[%s1 + $0x18] sm:$0xf]
    %v38 = vld [vmem:[%s1 + $0x1c] sm:$0xf]
    %v39 = vld [vmem:[%s1 + $0x20] sm:$0xf]
    %v40 = vld [vmem:[%s1 + $0x24] sm:$0xf]
    %v41 = vld [vmem:[%s1 + $0x28] sm:$0xf]
    %v42 = vld [vmem:[%s1 + $0x2c] sm:$0xf]
    %v43 = vld [vmem:[%s1 + $0x30] sm:$0xf]
    %v44 = vld [vmem:[%s1 + $0x34] sm:$0xf]
    %v45 = vld [vmem:[%s1 + $0x38] sm:$0xf]
    %v46 = vld [vmem:[%s1 + $0x3c] sm:$0xf]
    %v47 = vld [vmem:[%s2] sm:$0x1]
    %v49 = vlaneseq
    %v50 = vshrl.u32 %v49, 7
    %v51 = vsub.s32 0, %v50
    %v52 = vrot.slane %v47, %v51
    %v70 = vunpack.c.l.b16 %v31
    %v71 = vunpack.c.l.b16 %v32
    %v72 = vunpack.c.l.b16 %v33
    %v73 = vunpack.c.l.b16 %v34
    %v74 = vunpack.c.l.b16 %v35
    %v75 = vunpack.c.l.b16 %v36
    %v76 = vunpack.c.l.b16 %v37
    %v77 = vunpack.c.l.b16 %v38
    %v78 = vunpack.c.l.b16 %v39
    %v79 = vunpack.c.l.b16 %v40
    %v80 = vunpack.c.l.b16 %v41
    %v81 = vunpack.c.l.b16 %v42
    %v82 = vunpack.c.l.b16 %v43
    %v83 = vunpack.c.l.b16 %v44
    %v84 = vunpack.c.l.b16 %v45
    %v85 = vunpack.c.l.b16 %v46
    %v86 = vpack.c.b16 %v71, %v70
    %v87 = vpack.c.b16 %v73, %v72
    %v88 = vpack.c.b16 %v75, %v74
    %v89 = vpack.c.b16 %v77, %v76
    %v90 = vpack.c.b16 %v79, %v78
    %v91 = vpack.c.b16 %v81, %v80
    %v92 = vpack.c.b16 %v83, %v82
    %v93 = vpack.c.b16 %v85, %v84
    %102 = vmatprep.subr.bf16.mxu0 0
    %103 = vmatpush1.bf16.msra.mxu0 %v86
    %104 = vmatprep.subr.bf16.mxu0 0
    %105 = vmatpush1.bf16.msra.mxu0 %v87
    %106 = vmatprep.subr.bf16.mxu0 0
    %107 = vmatpush1.bf16.msra.mxu0 %v88
    %108 = vmatprep.subr.bf16.mxu0 0
    %109 = vmatpush1.bf16.msra.mxu0 %v89
    %110 = vmatprep.subr.bf16.mxu0 0
    %111 = vmatpush1.bf16.msra.mxu0 %v90
    %112 = vmatprep.subr.bf16.mxu0 0
    %113 = vmatpush1.bf16.msra.mxu0 %v91
    %114 = vmatprep.subr.bf16.mxu0 0
    %115 = vmatpush1.bf16.msra.mxu0 %v92
    %116 = vmatprep.subr.bf16.mxu0 0
    %117 = vmatpush1.bf16.msra.mxu0 %v93
    %118 = vmatprep.subr.bf16.mxu0 0
    %119 = vmatpush1.bf16.msra.mxu0 0
    %120 = vmatprep.subr.bf16.mxu0 0
    %121 = vmatpush1.bf16.msra.mxu0 0
    %122 = vmatprep.subr.bf16.mxu0 0
    %123 = vmatpush1.bf16.msra.mxu0 0
    %124 = vmatprep.subr.bf16.mxu0 0
    %125 = vmatpush1.bf16.msra.mxu0 0
    %126 = vmatprep.subr.bf16.mxu0 0
    %127 = vmatpush1.bf16.msra.mxu0 0
    %128 = vmatprep.subr.bf16.mxu0 0
    %129 = vmatpush1.bf16.msra.mxu0 0
    %130 = vmatprep.subr.bf16.mxu0 0
    %131 = vmatpush1.bf16.msra.mxu0 0
    %132 = vmatprep.subr.bf16.mxu0 0
    %133 = vmatpush1.bf16.msra.mxu0 0
    %134 = vmatprep.mubr.bf16.mxu0 0
    %135 = vmatmul.mubr.bf16.gmra.mrb[0].mxu0 %v30
    %v136 = vpop.f32.mrb[0].mxu0
    %v137 = vadd.f32 %v52, %v136
    %v138 = vpop.f32.mrb[0].mxu0
    %v139 = vpop.f32.mrb[0].mxu0
    %v140 = vpop.f32.mrb[0].mxu0
    %141 = vdwg.mxu0
    %142 = vst [vmem:[#allocation2] sm:$0xf] %v137
    // Predicated region
    $region14: #{block_compactor.1} parent=1 // pred_check
      _
    $region15: #{block_compactor.1} parent=1 // pred_check_branch
      %144 = sbr.rel (0) target = $region17
    $region16: #{block_compactor.1} parent=1 // pred_region
      %s146 = ssub.s32 64, 64
      %147 = vsyncadd [#allocation3], %s146
      %s149 = sshll.u32 [#allocation2], 4
      %s150 = int_to_ptr.vmem [resolvable:$true] %s149
      %152 = dma.vmem_to_hbm [thread:$0]  %s150, 64, %s3, [#allocation3]
    $region17: #{block_compactor.1} parent=1 // pred_fallthru
      _
    // Predicated region
    $region18: #{block_compactor.1} parent=1 // pred_check
      _
    $region19: #{block_compactor.1} parent=1 // pred_check_branch
      %154 = sbr.rel (0) target = $region21
    $region20: #{block_compactor.1} parent=1 // pred_region
      %155 = dma.done [#allocation3], 64
    $region21: #{block_compactor.1} parent=1 // pred_fallthru
      _
    %156 = vsyncpa [#allocation3], 1

</llo_original>
